<compile_context>
chip_gen: v5e
topology: v5e:2x2
jax: 0.10.0
libtpu: 0.0.40
codegen_flags: <defaults>
</compile_context>

<pallas_src>
import functools
import math

import jax
import jax.numpy as jnp
from jax.experimental import pallas as pl
from jax.experimental.pallas import tpu as pltpu


# ----------------------------------------------------------------------------
# PE buffer construction (plain-JAX glue, mirrors the PyTorch __init__)
# ----------------------------------------------------------------------------
def make_pe(d_model: int, max_len: int = 5000) -> jax.Array:
    position = jnp.arange(max_len, dtype=jnp.float32)[:, None]            # [L,1]
    div_term = jnp.exp(
        jnp.arange(0, d_model, 2, dtype=jnp.float32)
        * (-math.log(10000.0) / d_model)
    )                                                                      # [D/2]
    pe = jnp.zeros((max_len, 1, d_model), dtype=jnp.float32)
    pe = pe.at[:, 0, 0::2].set(jnp.sin(position * div_term))
    pe = pe.at[:, 0, 1::2].set(jnp.cos(position * div_term))
    return pe                                                              # [L,1,D]


# ----------------------------------------------------------------------------
# Kernels
# ----------------------------------------------------------------------------
def pe_add_kernel(x_ref, pe_ref, o_ref):
    # x_ref: (tS, B, D); pe_ref: (tS, D) lane-dense -> broadcast add over batch
    pe = pe_ref[...][:, None, :]
    o_ref[...] = (x_ref[...] + pe).astype(o_ref.dtype)


def pe_add_dropout_prng_kernel(seed_ref, x_ref, pe_ref, o_ref, *, threshold, scale):
    # TPU-only path: inverted dropout with the on-chip PRNG, re-seeded per grid
    # tile (seed, program_id) so tiles don't replay the same mask.
    pltpu.prng_seed(seed_ref[0], pl.program_id(0))
    y = x_ref[...] + pe_ref[...][:, None, :]
    bits = pltpu.bitcast(pltpu.prng_random_bits(y.shape), jnp.uint32)
    keep = bits >= jnp.uint32(threshold)            # P(keep) = 1 - p
    o_ref[...] = jnp.where(keep, y * scale, jnp.zeros_like(y)).astype(o_ref.dtype)


def pe_add_dropout_mask_kernel(x_ref, pe_ref, bits_ref, o_ref, *, threshold, scale):
    # Portable path (non-TPU backends / interpret): random bits streamed in.
    y = x_ref[...] + pe_ref[...][:, None, :]
    keep = bits_ref[...] >= jnp.uint32(threshold)
    o_ref[...] = jnp.where(keep, y * scale, jnp.zeros_like(y)).astype(o_ref.dtype)


# ----------------------------------------------------------------------------
# VMEM budgeting / tile selection
# ----------------------------------------------------------------------------
def _vmem_limit_and_budget() -> tuple[int, int]:
    phys = 128 << 20
    if jax.default_backend() == "tpu":
        try:
            info = pltpu.get_tpu_info()
            phys = int(getattr(info, "vmem_capacity_bytes", phys))
        except Exception:
            pass
    # 48 MiB scoped limit on 128-MiB generations (v5e/v6e), 32 MiB on v7x (64 MiB).
    limit = min(48 << 20, phys // 2)
    budget = (limit * 3) // 4          # headroom for pipeline bookkeeping
    return int(limit), int(budget)


def _choose_seq_tile(S: int, B: int, D: int, itemsize: int, budget: int) -> int:
    sub = max(8, 32 // itemsize)       # sublane tile: 8 f32 / 16 bf16 / 32 int8
    b_pad = -(-B // sub) * sub         # sublane padding of the batch axis
    d_pad = -(-D // 128) * 128         # lane padding
    # per seq position resident in VMEM: x tile + out tile + squeezed pe row,
    # each double-buffered by the Pallas pipeline.
    per_s = (2 * b_pad + 1) * d_pad * itemsize * 2
    ts = budget // max(per_s, 1)
    ts = max(sub, (ts // sub) * sub)
    return int(ts)


# ----------------------------------------------------------------------------
# Wrapper
# ----------------------------------------------------------------------------
def positional_encoding(x: jax.Array,
                        pe: jax.Array,
                        *,
                        p: float = 0.1,
                        deterministic: bool = True,
                        seed: int = 0,
                        seq_tile: int | None = None) -> jax.Array:
    """x: [seq_len, batch, d_model]; pe: [max_len, 1, d_model] (or [max_len, d_model])."""
    S, B, D = x.shape
    if p >= 1.0:
        raise ValueError(f"dropout p must be < 1, got {p}")

    pe2d = pe[:, 0, :] if pe.ndim == 3 else pe          # free squeeze, no HBM pass
    if pe2d.dtype != x.dtype:
        pe2d = pe2d.astype(x.dtype)                     # keep kernel in packed dtype

    itemsize = jnp.dtype(x.dtype).itemsize
    sub = max(8, 32 // itemsize)
    vmem_limit, vmem_budget = _vmem_limit_and_budget()

    ts = int(seq_tile) if seq_tile is not None else _choose_seq_tile(
        S, B, D, itemsize, vmem_budget)

    if S >= sub:
        ts = max(sub, (min(ts, S) // sub) * sub)
        if seq_tile is None and pl.cdiv(S, ts) < 2 and S >= 2 * sub:
            # guarantee >=2 grid steps so ("parallel",) can shard the sequence
            # across v7x's two TensorCores (harmless on v5e/v6e).
            half = -(-S // 2)
            ts = -(-half // sub) * sub
        pe_in = pe2d
    else:
        # tiny sequences: one full-extent block; slice pe so its leading block
        # dim equals the full array dim (keeps the (8,128) rule satisfied).
        ts = S
        pe_in = pe2d[:S]

    grid = (pl.cdiv(S, ts),)
    out_shape = jax.ShapeDtypeStruct((S, B, D), x.dtype)
    compiler_params = pltpu.CompilerParams(
        dimension_semantics=("parallel",),              # megacore split on v7x
        vmem_limit_bytes=vmem_limit,
    )

    x_spec = pl.BlockSpec((ts, B, D), lambda i: (i, 0, 0))
    pe_spec = pl.BlockSpec((ts, D), lambda i: (i, 0))
    out_spec = pl.BlockSpec((ts, B, D), lambda i: (i, 0, 0))

    if deterministic or p <= 0.0:
        # eval-mode dropout == identity: just the tiled broadcast add
        return pl.pallas_call(
            pe_add_kernel,
            out_shape=out_shape,
            grid=grid,
            in_specs=[x_spec, pe_spec],
            out_specs=out_spec,
            compiler_params=compiler_params,
        )(x, pe_in)

    threshold = min(int(round(p * 2.0 ** 32)), 2 ** 32 - 1)
    scale = 1.0 / (1.0 - p)

    if jax.default_backend() == "tpu":
        # training mode on TPU: scalar seed prefetched to SMEM, on-chip PRNG
        kernel = functools.partial(pe_add_dropout_prng_kernel,
                                   threshold=threshold, scale=scale)
        grid_spec = pltpu.PrefetchScalarGridSpec(
            num_scalar_prefetch=1,
            grid=grid,
            in_specs=[
                pl.BlockSpec((ts, B, D), lambda i, s: (i, 0, 0)),
                pl.BlockSpec((ts, D), lambda i, s: (i, 0)),
            ],
            out_specs=pl.BlockSpec((ts, B, D), lambda i, s: (i, 0, 0)),
        )
        seeds = jnp.asarray([seed], dtype=jnp.int32)
        return pl.pallas_call(
            kernel,
            out_shape=out_shape,
            grid_spec=grid_spec,
            compiler_params=compiler_params,
        )(seeds, x, pe_in)

    # Non-TPU backend (e.g. CPU interpret): the stateful TPU PRNG has no
    # lowering, so stream precomputed random bits through the same tiling.
    bits = jax.random.bits(jax.random.PRNGKey(seed), (S, B, D), dtype=jnp.uint32)
    bits_spec = pl.BlockSpec((ts, B, D), lambda i: (i, 0, 0))
    kernel = functools.partial(pe_add_dropout_mask_kernel,
                               threshold=threshold, scale=scale)
    return pl.pallas_call(
        kernel,
        out_shape=out_shape,
        grid=grid,
        in_specs=[x_spec, pe_spec, bits_spec],
        out_specs=out_spec,
        compiler_params=compiler_params,
    )(x, pe_in, bits)


# ----------------------------------------------------------------------------
# Demo / self-check
# ----------------------------------------------------------------------------
if __name__ == "__main__":
    key = jax.random.PRNGKey(0)

    # --- 1) module-default small shapes, eval mode: exact match ------------
    SEQ, BATCH, D_MODEL = 8, 2, 32
    MAX_LEN = 64
    k1, k2, k3 = jax.random.split(key, 3)
    x = jax.random.normal(k1, (SEQ, BATCH, D_MODEL), dtype=jnp.float32)
    pe = make_pe(D_MODEL, MAX_LEN)

    y = jax.block_until_ready(positional_encoding(x, pe, deterministic=True))
    y_ref = x + pe[:SEQ]
    assert y.shape == (SEQ, BATCH, D_MODEL)
    assert jnp.allclose(y, y_ref, atol=1e-6, rtol=1e-6), "PE add mismatch (eval)"

    # --- 2) multi-block grid (seq_tile=8 -> 4 grid steps), lane-dense D ----
    S2, B2, D2 = 32, 4, 128
    x2 = jax.random.normal(k2, (S2, B2, D2), dtype=jnp.float32)
    pe2 = make_pe(D2, 64)
    y2 = jax.block_until_ready(
        positional_encoding(x2, pe2, deterministic=True, seq_tile=8))
    y2_ref = x2 + pe2[:S2]
    assert jnp.allclose(y2, y2_ref, atol=1e-6, rtol=1e-6), "tiled PE add mismatch"

    # auto-tiled path (exercises the >=2-step grid clamp)
    y2b = jax.block_until_ready(positional_encoding(x2, pe2, deterministic=True))
    assert jnp.allclose(y2b, y2_ref, atol=1e-6, rtol=1e-6), "auto-tiled mismatch"

    # training mode on the tiled grid: every element is 0 or (x+pe)/(1-p)
    p_drop = 0.1
    y2_tr = jax.block_until_ready(
        positional_encoding(x2, pe2, p=p_drop, deterministic=False,
                            seed=1234, seq_tile=8))
    assert y2_tr.shape == (S2, B2, D2)
    assert bool(jnp.all(jnp.isfinite(y2_tr)))
    scaled = y2_ref / (1.0 - p_drop)
    ok = jnp.isclose(y2_tr, 0.0) | jnp.isclose(y2_tr, scaled, atol=1e-5, rtol=1e-5)
    assert bool(jnp.all(ok)), "dropout output not {0, scaled} valued"
    keep_frac = float(jnp.mean((~jnp.isclose(y2_tr, 0.0)).astype(jnp.float32)))
    assert 0.7 < keep_frac <= 1.0, f"implausible keep fraction {keep_frac}"

    # --- 3) non-divisible seq (masked boundary block), eval mode -----------
    S3, B3, D3 = 20, 2, 128
    x3 = jax.random.normal(k3, (S3, B3, D3), dtype=jnp.float32)
    pe3 = make_pe(D3, 64)
    y3 = jax.block_until_ready(
        positional_encoding(x3, pe3, deterministic=True, seq_tile=8))
    assert jnp.allclose(y3, x3 + pe3[:S3], atol=1e-6, rtol=1e-6), \
        "masked boundary block mismatch"

    print("KERNEL_OK")
</pallas_src>

<mosaic_0001>
module attributes {stable_mosaic.version = 11 : i64} {
  func.func @pe_add_kernel(%arg0: i32, %arg1: memref<8x2x32xf32, #tpu.memory_space<vmem>>, %arg2: memref<8x32xf32, #tpu.memory_space<vmem>>, %arg3: memref<8x2x32xf32, #tpu.memory_space<vmem>>) attributes {dimension_semantics = [#tpu.dimension_semantics<parallel>], iteration_bounds = array<i64: 1>, scalar_prefetch = 0 : i64, scratch_operands = 0 : i64, tpu.core_type = #tpu.core_type<tc>, window_params = [{transform_indices = @transform_0, window_bounds = array<i64: 8, 2, 32>}, {transform_indices = @transform_1, window_bounds = array<i64: 8, 32>}, {transform_indices = @transform_2, window_bounds = array<i64: 8, 2, 32>}]} {
    %c0 = arith.constant 0 : index
    %c0_0 = arith.constant 0 : index
    %0 = vector.load %arg2[%c0, %c0_0] : memref<8x32xf32, #tpu.memory_space<vmem>>, vector<8x32xf32>
    %1 = vector.shape_cast %0 : vector<8x32xf32> to vector<8x1x32xf32>
    %c0_1 = arith.constant 0 : index
    %c0_2 = arith.constant 0 : index
    %c0_3 = arith.constant 0 : index
    %2 = vector.load %arg1[%c0_1, %c0_2, %c0_3] : memref<8x2x32xf32, #tpu.memory_space<vmem>>, vector<8x2x32xf32>
    %3 = vector.broadcast %1 : vector<8x1x32xf32> to vector<8x2x32xf32>
    %4 = arith.addf %2, %3 : vector<8x2x32xf32>
    %c0_4 = arith.constant 0 : index
    %c0_5 = arith.constant 0 : index
    %c0_6 = arith.constant 0 : index
    %5 = vector.load %arg3[%c0_4, %c0_5, %c0_6] : memref<8x2x32xf32, #tpu.memory_space<vmem>>, vector<8x2x32xf32>
    tpu.vector_store %arg3[%c0_4, %c0_5, %c0_6], %4 {strides = array<i32>} : memref<8x2x32xf32, #tpu.memory_space<vmem>>, vector<8x2x32xf32>,
    return
  }
  func.func @transform_0(%arg0: i32) -> (i32, i32, i32) {
    %c0_i32 = arith.constant 0 : i32
    %c0_i32_0 = arith.constant 0 : i32
    %c0_i32_1 = arith.constant 0 : i32
    return %arg0, %c0_i32, %c0_i32_0 : i32, i32, i32
  }
  func.func @transform_1(%arg0: i32) -> (i32, i32) {
    %c0_i32 = arith.constant 0 : i32
    %c0_i32_0 = arith.constant 0 : i32
    return %arg0, %c0_i32 : i32, i32
  }
  func.func @transform_2(%arg0: i32) -> (i32, i32, i32) {
    %c0_i32 = arith.constant 0 : i32
    %c0_i32_0 = arith.constant 0 : i32
    %c0_i32_1 = arith.constant 0 : i32
    return %arg0, %c0_i32, %c0_i32_0 : i32, i32, i32
  }
}

</mosaic_0001>

<llo_original>
// kernel: tpu_custom_call.1
$region0: #{tpu_custom_call.1}
  #allocation0 [shape = 'u32[]', space=smem, size = 0x4, offset = 0x4, fixed_abs, tag = 'smem constant byte address 0x4 - core index']
  #allocation1 [shape = 'u32[72,128]{1,0:T(1,128)}', space=vmem, size = 0x9000, scoped, tag = 'internal scratch']
  %s0 = inlined_call_operand.vmem [shape: f32[8,2,32], index: 0, kind: input, shape index: {}]
  %s1 = inlined_call_operand.vmem [shape: f32[64,32], index: 1, kind: input, shape index: {}]
  %s2 = inlined_call_operand.hbm [shape: f32[8,2,32], index: 2, kind: output, shape index: {}]
  %s3 = sld [smem:[#allocation0]]
  $region18: #{tpu_custom_call.1} parent=0
    _
  %s5 = ssub.s32 1, %s3
  %s6 = scalar_select 0, %s5, %s3
  $region1: #{tpu_custom_call.1} parent=0
    #allocation2 [shape = 'u8[8192]{0}', space=vmem, size = 0x2000, scoped, tag = 'output window, operand 0, single buffered']
    #allocation3 [shape = 's32[1]{0}', space=sflag, size = 0x4, scoped, tag = 'scoped memory for tpu_custom_call.1']
    %7 = vsyncpa [#allocation3], 0
    // Predicated region
    $region2: #{tpu_custom_call.1} parent=1 // pred_check
      _
    $region3: #{tpu_custom_call.1} parent=1 // pred_check_branch
      %9 = sbr.rel (0) target = $region5
    $region4: #{tpu_custom_call.1} parent=1 // pred_region
      _
    $region5: #{tpu_custom_call.1} parent=1 // pred_fallthru
      _
    // Predicated region
    $region6: #{tpu_custom_call.1} parent=1 // pred_check
      _
    $region7: #{tpu_custom_call.1} parent=1 // pred_check_branch
      %11 = sbr.rel (0) target = $region9
    $region8: #{tpu_custom_call.1} parent=1 // pred_region
      _
    $region9: #{tpu_custom_call.1} parent=1 // pred_fallthru
      _
    %v12 = vld [vmem:[%s1] sm:$0xff]
    %v14 = vrot.slane %v12, 1
    %v15 = vrot.slane %v12, 2
    %v16 = vrot.slane %v12, 3
    %v17 = vrot.slane %v12, 4
    %v18 = vrot.slane %v12, 5
    %v19 = vrot.slane %v12, 6
    %v20 = vrot.slane %v12, 7
    %v21 = vld [vmem:[%s0] sm:$0x3]
    %v22 = vld [vmem:[%s0 + $0x2] sm:$0x3]
    %v23 = vld [vmem:[%s0 + $0x4] sm:$0x3]
    %v24 = vld [vmem:[%s0 + $0x6] sm:$0x3]
    %v25 = vld [vmem:[%s0 + $0x8] sm:$0x3]
    %v26 = vld [vmem:[%s0 + $0xa] sm:$0x3]
    %v27 = vld [vmem:[%s0 + $0xc] sm:$0x3]
    %v28 = vld [vmem:[%s0 + $0xe] sm:$0x3]
    %v29 = vperm.slane %v12, 0
    %v30 = vperm.slane %v14, 0
    %v31 = vperm.slane %v15, 0
    %v32 = vperm.slane %v16, 0
    %v33 = vperm.slane %v17, 0
    %v34 = vperm.slane %v18, 0
    %v35 = vperm.slane %v19, 0
    %v36 = vperm.slane %v20, 0
    %v45 = vadd.f32 %v21, %v29
    %v46 = vadd.f32 %v22, %v30
    %v47 = vadd.f32 %v23, %v31
    %v48 = vadd.f32 %v24, %v32
    %v49 = vadd.f32 %v25, %v33
    %v50 = vadd.f32 %v26, %v34
    %v51 = vadd.f32 %v27, %v35
    %v52 = vadd.f32 %v28, %v36
    %vm53 = vcmask 254976
    %54 = vst.msk [vmem:[#allocation2] sm:$0x3] %vm53, %v45
    %55 = vst.msk [vmem:[#allocation2 + $0x2] sm:$0x3] %vm53, %v46
    %56 = vst.msk [vmem:[#allocation2 + $0x4] sm:$0x3] %vm53, %v47
    %57 = vst.msk [vmem:[#allocation2 + $0x6] sm:$0x3] %vm53, %v48
    %58 = vst.msk [vmem:[#allocation2 + $0x8] sm:$0x3] %vm53, %v49
    %59 = vst.msk [vmem:[#allocation2 + $0xa] sm:$0x3] %vm53, %v50
    %60 = vst.msk [vmem:[#allocation2 + $0xc] sm:$0x3] %vm53, %v51
    %61 = vst.msk [vmem:[#allocation2 + $0xe] sm:$0x3] %vm53, %v52
    // Predicated region
    $region10: #{tpu_custom_call.1} parent=1 // pred_check
      _
    $region11: #{tpu_custom_call.1} parent=1 // pred_check_branch
      %63 = sbr.rel (0) target = $region13
    $region12: #{tpu_custom_call.1} parent=1 // pred_region
      %65 = vsyncadd [#allocation3], 0
      %s66 = sshll.u32 [#allocation2], 4
      %s67 = int_to_ptr.vmem [resolvable:$true] %s66
      %s68 = sshll.u32 %s2, 4
      %s69 = int_to_ptr.hbm [resolvable:$true] %s68
      %74 = dma.vmem_to_hbm [thread:$0]  %s67, 256, %s69, [#allocation3], 32, 32, 2
    $region13: #{tpu_custom_call.1} parent=1 // pred_fallthru
      _
    // Predicated region
    $region14: #{tpu_custom_call.1} parent=1 // pred_check
      _
    $region15: #{tpu_custom_call.1} parent=1 // pred_check_branch
      %76 = sbr.rel (0) target = $region17
    $region16: #{tpu_custom_call.1} parent=1 // pred_region
      %78 = dma.done [#allocation3], 256
    $region17: #{tpu_custom_call.1} parent=1 // pred_fallthru
      _
    %79 = vsyncpa [#allocation3], 1

</llo_original>
